<compile_context>
chip_gen: v6e
topology: v6e:2x2x1
jax: 0.10.0
libtpu: 0.0.40
codegen_flags: <defaults>
</compile_context>

<pallas_src>
import functools
import math

import jax
import jax.numpy as jnp
from jax.experimental import pallas as pl
from jax.experimental.pallas import tpu as pltpu


def _round_up(x, m):
    return ((x + m - 1) // m) * m


def _cdiv(a, b):
    return (a + b - 1) // b


def _vmem_capacity_bytes():
    """Physical VMEM of the local chip; conservative (v7x-safe) fallback."""
    try:
        cap = int(getattr(pltpu.get_tpu_info(), "vmem_capacity_bytes", 0))
        if cap > 0:
            return cap
    except Exception:
        pass
    return 64 * 1024 * 1024


def _vmem_knobs():
    cap = _vmem_capacity_bytes()
    budget = min(cap // 4, 48 * 1024 * 1024)                     # per-step working set
    limit = max(32 * 1024 * 1024, min((cap * 3) // 4, 96 * 1024 * 1024))
    return budget, limit


def _geometry(W):
    wp2 = _round_up(W + 2, 8)                 # lane-padded, conv-padded width
    halo_n = _round_up(2 * wp2 + 2, 128)      # flattened halo block (>= 2 rows + 2)
    t0 = halo_n // math.gcd(wp2, halo_n)      # smallest th with halo_n | th*wp2
    return wp2, halo_n, t0


# ----------------------------------------------------------------------------
# Pallas kernel: one (batch, row-tile) step of 3x3 conv + bias + ReLU as a
# single im2col matmul.  The im2col is 9 constant lane shifts of the flattened
# window written straight into a VMEM scratch (no concatenate copy).
# ----------------------------------------------------------------------------
def _conv3x3_im2col_kernel(x_ref, h_ref, w_ref, b_ref, o_ref, p_ref, *,
                           wp2, cin, cin_stride, n):
    # x_ref: (Cin, n)               bf16  main tile: th rows x Wp2, flattened
    # h_ref: (Cin, HALO_N)          bf16  halo: the 2 rows below the tile (+slack)
    # w_ref: (Cout_p, 9*cin_stride) bf16  taps, k = (dy*3+dx)*cin_stride + ci
    # b_ref: (Cout_p, 1)            f32
    # o_ref: (Cout_p, n)            bf16  lane-dense output tile
    # p_ref: (9*cin_stride, n)      bf16  VMEM scratch: im2col patches
    window = jnp.concatenate([x_ref[...], h_ref[...]], axis=1)   # bf16, no f32 trip
    for dy in range(3):
        for dx in range(3):
            k = dy * 3 + dx
            off = dy * wp2 + dx               # constant lane shift for tap (dy, dx)
            r0 = k * cin_stride
            p_ref[r0:r0 + cin, :] = window[:, off:off + n]
            if cin_stride != cin:             # keep padded K rows finite (NaN*0 hazard)
                p_ref[r0 + cin:r0 + cin_stride, :] = jnp.zeros(
                    (cin_stride - cin, n), jnp.bfloat16)
    acc = jnp.dot(w_ref[...], p_ref[...], preferred_element_type=jnp.float32)
    acc = acc + b_ref[...]                    # bias (f32)
    o_ref[...] = jnp.maximum(acc, 0.0).astype(o_ref.dtype)       # act_type='relu'


def _choose_tile_h(B, H, W, cin_stride, cout_p, budget):
    """Largest lane-dense row tile that fits the VMEM budget (>= 2 grid steps)."""
    wp2, halo_n, t0 = _geometry(W)

    def working_set(th):
        n = th * wp2
        in_b = cin_stride * (n + halo_n) * 2          # bf16 main + halo block
        out_b = cout_p * n * 2                        # bf16 output tile
        patches = 9 * cin_stride * n * 2              # scratch (single-buffered)
        acc = cout_p * n * 4                          # f32 accumulator value
        return 2 * (in_b + out_b) + patches + acc     # x2: double buffering

    h_cap = _round_up(H, t0)
    th, cand = t0, t0
    while cand <= h_cap:
        if working_set(cand) <= budget:
            th = cand
        cand += t0
    # v7x megacore: keep >= 2 "parallel" grid steps whenever the shape allows.
    if B * _cdiv(H, th) < 2:
        th = max(t0, min(th, _round_up(_cdiv(H, 2), t0)))
    return th


def ecb_pallas_forward(x_nchw, RK, RB, *, tile_h=None, out_dtype=jnp.bfloat16,
                       keep_padded=False):
    """ECB eval forward: relu(conv2d(x, RK, RB, stride=1, padding=1)).

    bf16 inputs/weights and bf16 output (f32 accumulation) is a deliberate
    inference-precision trade-off; pass out_dtype=jnp.float32 for f32 output.
    keep_padded=True returns the padded (Cout_p, Hp, Wp2) layout so a chain of
    ECB layers only de-pads once.
    """
    B, Cin, H, W = x_nchw.shape
    Cout = RK.shape[0]
    cout_p = _round_up(Cout, 16)                     # bf16-sublane-clean channel pad
    cin_stride = Cin if Cin % 2 == 0 else Cin + 1    # keep bf16 sublane packing aligned
    wp2, halo_n, t0 = _geometry(W)
    budget, vmem_limit = _vmem_knobs()

    th = tile_h if tile_h is not None else _choose_tile_h(B, H, W, cin_stride,
                                                          cout_p, budget)
    n = th * wp2
    assert th > 0 and n % halo_n == 0, (
        f"tile_h={th}: th*Wp2 ({n}) must be a multiple of {halo_n} (lane-dense)")
    n_tiles = _cdiv(H, th)
    hp = n_tiles * th                                # row-padded height
    halo_stride = n // halo_n

    # ---- input: one fused cast+pad pass, then a free (row-major) flattening ----
    # TODO(synk): pack pairs of batch images along the sublane axis when Cin < 8
    # to fill vregs on very small-channel configs.
    rows = hp + _cdiv(halo_n, wp2)                   # enough rows below the last tile
    xp = jnp.pad(x_nchw.astype(jnp.bfloat16),
                 ((0, 0), (0, 0), (1, rows - 1 - H), (1, wp2 - W - 1)))
    x_flat = xp.reshape(B, Cin, rows * wp2)          # contiguous -> no data movement

    # ---- weights: (Cout,Cin,3,3) -> (Cout_p, 9*cin_stride), bf16 ----
    w_taps = jnp.transpose(RK, (0, 2, 3, 1))         # (Cout, 3, 3, Cin)
    if cin_stride != Cin:
        w_taps = jnp.pad(w_taps, ((0, 0), (0, 0), (0, 0), (0, cin_stride - Cin)))
    w_mat = w_taps.reshape(Cout, 9 * cin_stride)
    w_mat = jnp.pad(w_mat, ((0, cout_p - Cout), (0, 0))).astype(jnp.bfloat16)
    b_mat = jnp.pad(RB.reshape(Cout, 1), ((0, cout_p - Cout), (0, 0))).astype(jnp.float32)

    kernel = functools.partial(_conv3x3_im2col_kernel, wp2=wp2, cin=Cin,
                               cin_stride=cin_stride, n=n)
    out_itemsize = jnp.dtype(out_dtype).itemsize
    flops = 2 * B * hp * wp2 * 9 * Cin * cout_p
    bytes_accessed = (int(x_flat.size) * 2 + B * n_tiles * Cin * halo_n * 2
                      + int(w_mat.size) * 2 + int(b_mat.size) * 4
                      + B * cout_p * hp * wp2 * out_itemsize)

    out_flat = pl.pallas_call(
        kernel,
        out_shape=jax.ShapeDtypeStruct((B, cout_p, n_tiles * n), out_dtype),
        grid=(B, n_tiles),
        in_specs=[
            # main tile: padded rows [t*th, t*th+th), flattened on the lane axis
            pl.BlockSpec((None, Cin, n), lambda b, t: (b, 0, t)),
            # halo: the 128*k flattened columns right below the tile (2 extra rows)
            pl.BlockSpec((None, Cin, halo_n),
                         lambda b, t: (b, 0, (t + 1) * halo_stride)),
            pl.BlockSpec((cout_p, 9 * cin_stride), lambda b, t: (0, 0)),
            pl.BlockSpec((cout_p, 1), lambda b, t: (0, 0)),
        ],
        out_specs=pl.BlockSpec((None, cout_p, n), lambda b, t: (b, 0, t)),
        scratch_shapes=[pltpu.VMEM((9 * cin_stride, n), jnp.bfloat16)],
        compiler_params=pltpu.CompilerParams(
            dimension_semantics=("parallel", "parallel"),
            vmem_limit_bytes=vmem_limit),
        cost_estimate=pl.CostEstimate(flops=flops, transcendentals=0,
                                      bytes_accessed=bytes_accessed),
    )(x_flat, x_flat, w_mat, b_mat)

    out = out_flat.reshape(B, cout_p, hp, wp2)
    if keep_padded:
        return out                                   # chained layers de-pad once
    return out[:, :Cout, :H, :W]


# ----------------------------------------------------------------------------
# Parameter construction (deterministic, synthetic) + re-parameterization
# (plain-JAX glue mirroring ECB.rep_params / SeqConv3x3.rep_params).
# ----------------------------------------------------------------------------
_SOBEL_X = jnp.array([[1., 0., -1.], [2., 0., -2.], [1., 0., -1.]], jnp.float32)
_SOBEL_Y = jnp.array([[1., 2., 1.], [0., 0., 0.], [-1., -2., -1.]], jnp.float32)
_LAPLACE = jnp.array([[0., 1., 0.], [1., -4., 1.], [0., 1., 0.]], jnp.float32)


def init_ecb_params(key, cin, cout, depth_multiplier):
    mid = int(cout * depth_multiplier)
    keys = jax.random.split(key, 18)
    n = lambda k, shape, s=0.1: (s * jax.random.normal(k, shape)).astype(jnp.float32)
    p = {
        'k3': n(keys[0], (cout, cin, 3, 3)),
        'b3': n(keys[1], (cout,), 0.01),
        'c13_k0': n(keys[2], (mid, cin, 1, 1)),
        'c13_b0': n(keys[3], (mid,), 0.01),
        'c13_k1': n(keys[4], (cout, mid, 3, 3)),
        'c13_b1': n(keys[5], (cout,), 0.01),
    }
    for i, name in enumerate(('sbx', 'sby', 'lpl')):
        base = 6 + 4 * i
        p[f'{name}_k0'] = n(keys[base], (cout, cin, 1, 1))
        p[f'{name}_b0'] = n(keys[base + 1], (cout,), 0.01)
        p[f'{name}_scale'] = n(keys[base + 2], (cout, 1, 1, 1), 0.001)
        p[f'{name}_bias'] = n(keys[base + 3], (cout,), 0.001)
    return p


def ecb_rep_params(p, cin, cout, with_idt=True):
    RK = p['k3']
    RB = p['b3']

    # conv1x1 -> conv3x3 branch
    k0 = p['c13_k0'][:, :, 0, 0]
    b0 = p['c13_b0']
    k1 = p['c13_k1']
    b1 = p['c13_b1']
    RK = RK + jnp.einsum('omyx,mi->oiyx', k1, k0)
    RB = RB + jnp.einsum('omyx,m->o', k1, b0) + b1

    # edge-detector branches (depthwise 3x3 after 1x1)
    for name, mask in (('sbx', _SOBEL_X), ('sby', _SOBEL_Y), ('lpl', _LAPLACE)):
        k0 = p[f'{name}_k0'][:, :, 0, 0]
        b0 = p[f'{name}_b0']
        scale = p[f'{name}_scale'].reshape(cout)
        bias = p[f'{name}_bias']
        tmp = scale[:, None, None] * mask[None, :, :]
        RK = RK + jnp.einsum('oyx,oi->oiyx', tmp, k0)
        RB = RB + b0 * tmp.sum(axis=(1, 2)) + bias

    if with_idt and cin == cout:
        idx = jnp.arange(cout)
        RK = RK + jnp.zeros((cout, cin, 3, 3), jnp.float32).at[idx, idx, 1, 1].set(1.0)
    return RK, RB


# ----------------------------------------------------------------------------
# Reference (plain JAX) for verification.
# ----------------------------------------------------------------------------
def ecb_reference(x_nchw, RK, RB, *, match_bf16=False):
    lhs, rhs = x_nchw, RK
    if match_bf16:
        lhs = lhs.astype(jnp.bfloat16)
        rhs = rhs.astype(jnp.bfloat16)
    y = jax.lax.conv_general_dilated(
        lhs, rhs, window_strides=(1, 1), padding=((1, 1), (1, 1)),
        dimension_numbers=('NCHW', 'OIHW', 'NCHW'),
        preferred_element_type=jnp.float32)
    y = y + RB.reshape(1, -1, 1, 1)
    return jnp.maximum(y, 0.0)


if __name__ == "__main__":
    depth_multiplier = 2.0
    key = jax.random.PRNGKey(0)
    k_x, k_x2, k_p = jax.random.split(key, 3)

    B, C, H, W = 2, 4, 16, 16                  # inp_planes == out_planes -> with_idt
    params = init_ecb_params(k_p, C, C, depth_multiplier)
    RK, RB = ecb_rep_params(params, C, C, with_idt=True)

    fwd = jax.jit(ecb_pallas_forward,
                  static_argnames=("tile_h", "out_dtype", "keep_padded"))

    x = jax.random.normal(k_x, (B, C, H, W), dtype=jnp.float32)
    y = jax.block_until_ready(fwd(x, RK, RB))
    assert y.shape == (B, C, H, W)
    assert y.dtype == jnp.bfloat16
    y32 = y.astype(jnp.float32)
    ref_bf = ecb_reference(x, RK, RB, match_bf16=True)
    ref_bf_q = ref_bf.astype(jnp.bfloat16).astype(jnp.float32)   # same output rounding
    assert jnp.allclose(y32, ref_bf_q, atol=3e-2, rtol=3e-2), \
        "mismatch vs bf16-matched reference"
    assert jnp.allclose(y32, ecb_reference(x, RK, RB), atol=1e-1, rtol=1e-1), \
        "mismatch vs f32 reference"

    # Taller image with an explicit row tile to exercise the multi-tile (halo) path.
    H2, W2 = 32, 32
    x2 = jax.random.normal(k_x2, (B, C, H2, W2), dtype=jnp.float32)
    y2 = jax.block_until_ready(fwd(x2, RK, RB, tile_h=16))
    assert y2.shape == (B, C, H2, W2)
    y2_32 = y2.astype(jnp.float32)
    ref2 = ecb_reference(x2, RK, RB, match_bf16=True).astype(jnp.bfloat16).astype(jnp.float32)
    assert jnp.allclose(y2_32, ref2, atol=3e-2, rtol=3e-2), \
        "mismatch (tiled) vs bf16-matched reference"

    print("KERNEL_OK")
</pallas_src>

<mosaic_0001>
module attributes {stable_mosaic.version = 11 : i64} {
  func.func @_conv3x3_im2col_kernel(%arg0: i32, %arg1: i32, %arg2: memref<1x4x384xbf16, #tpu.memory_space<vmem>>, %arg3: memref<1x4x128xbf16, #tpu.memory_space<vmem>>, %arg4: memref<16x36xbf16, #tpu.memory_space<vmem>>, %arg5: memref<16x1xf32, #tpu.memory_space<vmem>>, %arg6: memref<1x16x384xbf16, #tpu.memory_space<vmem>>, %arg7: memref<36x384xbf16, #tpu.memory_space<vmem>>) attributes {dimension_semantics = [#tpu.dimension_semantics<parallel>, #tpu.dimension_semantics<parallel>], iteration_bounds = array<i64: 2, 1>, scalar_prefetch = 0 : i64, scratch_operands = 1 : i64, tpu.core_type = #tpu.core_type<tc>, window_params = [{transform_indices = @transform_0, window_bounds = array<i64: 1, 4, 384>}, {transform_indices = @transform_1, window_bounds = array<i64: 1, 4, 128>}, {pipeline_mode = #tpu.pipeline_mode<synchronous>, transform_indices = @transform_2, window_bounds = array<i64: 16, 36>}, {pipeline_mode = #tpu.pipeline_mode<synchronous>, transform_indices = @transform_3, window_bounds = array<i64: 16, 1>}, {transform_indices = @transform_4, window_bounds = array<i64: 1, 16, 384>}]} {
    %c0 = arith.constant 0 : index
    %c0_0 = arith.constant 0 : index
    %c0_1 = arith.constant 0 : index
    %0 = vector.load %arg2[%c0, %c0_0, %c0_1] : memref<1x4x384xbf16, #tpu.memory_space<vmem>>, vector<1x4x384xbf16>
    %1 = vector.shape_cast %0 : vector<1x4x384xbf16> to vector<4x384xbf16>
    %c0_2 = arith.constant 0 : index
    %c0_3 = arith.constant 0 : index
    %c0_4 = arith.constant 0 : index
    %2 = vector.load %arg3[%c0_2, %c0_3, %c0_4] : memref<1x4x128xbf16, #tpu.memory_space<vmem>>, vector<1x4x128xbf16>
    %3 = vector.shape_cast %2 : vector<1x4x128xbf16> to vector<4x128xbf16>
    %4 = tpu.concatenate %1, %3 in 1 : vector<4x384xbf16>, vector<4x128xbf16> -> vector<4x512xbf16>
    %5 = vector.extract_strided_slice %4 {offsets = [0, 0], sizes = [4, 384], strides = [1, 1]} : vector<4x512xbf16> to vector<4x384xbf16>
    %c0_5 = arith.constant 0 : index
    %c0_6 = arith.constant 0 : index
    %6 = vector.load %arg7[%c0_5, %c0_6] : memref<36x384xbf16, #tpu.memory_space<vmem>>, vector<4x384xbf16>
    tpu.vector_store %arg7[%c0_5, %c0_6], %5 {strides = array<i32>} : memref<36x384xbf16, #tpu.memory_space<vmem>>, vector<4x384xbf16>,
    %7 = vector.extract_strided_slice %4 {offsets = [0, 1], sizes = [4, 384], strides = [1, 1]} : vector<4x512xbf16> to vector<4x384xbf16>
    %c4 = arith.constant 4 : index
    %c0_7 = arith.constant 0 : index
    %8 = vector.load %arg7[%c4, %c0_7] : memref<36x384xbf16, #tpu.memory_space<vmem>>, vector<4x384xbf16>
    tpu.vector_store %arg7[%c4, %c0_7], %7 {strides = array<i32>} : memref<36x384xbf16, #tpu.memory_space<vmem>>, vector<4x384xbf16>,
    %9 = vector.extract_strided_slice %4 {offsets = [0, 2], sizes = [4, 384], strides = [1, 1]} : vector<4x512xbf16> to vector<4x384xbf16>
    %c8 = arith.constant 8 : index
    %c0_8 = arith.constant 0 : index
    %10 = vector.load %arg7[%c8, %c0_8] : memref<36x384xbf16, #tpu.memory_space<vmem>>, vector<4x384xbf16>
    tpu.vector_store %arg7[%c8, %c0_8], %9 {strides = array<i32>} : memref<36x384xbf16, #tpu.memory_space<vmem>>, vector<4x384xbf16>,
    %11 = vector.extract_strided_slice %4 {offsets = [0, 24], sizes = [4, 384], strides = [1, 1]} : vector<4x512xbf16> to vector<4x384xbf16>
    %c12 = arith.constant 12 : index
    %c0_9 = arith.constant 0 : index
    %12 = vector.load %arg7[%c12, %c0_9] : memref<36x384xbf16, #tpu.memory_space<vmem>>, vector<4x384xbf16>
    tpu.vector_store %arg7[%c12, %c0_9], %11 {strides = array<i32>} : memref<36x384xbf16, #tpu.memory_space<vmem>>, vector<4x384xbf16>,
    %13 = vector.extract_strided_slice %4 {offsets = [0, 25], sizes = [4, 384], strides = [1, 1]} : vector<4x512xbf16> to vector<4x384xbf16>
    %c16 = arith.constant 16 : index
    %c0_10 = arith.constant 0 : index
    %14 = vector.load %arg7[%c16, %c0_10] : memref<36x384xbf16, #tpu.memory_space<vmem>>, vector<4x384xbf16>
    tpu.vector_store %arg7[%c16, %c0_10], %13 {strides = array<i32>} : memref<36x384xbf16, #tpu.memory_space<vmem>>, vector<4x384xbf16>,
    %15 = vector.extract_strided_slice %4 {offsets = [0, 26], sizes = [4, 384], strides = [1, 1]} : vector<4x512xbf16> to vector<4x384xbf16>
    %c20 = arith.constant 20 : index
    %c0_11 = arith.constant 0 : index
    %16 = vector.load %arg7[%c20, %c0_11] : memref<36x384xbf16, #tpu.memory_space<vmem>>, vector<4x384xbf16>
    tpu.vector_store %arg7[%c20, %c0_11], %15 {strides = array<i32>} : memref<36x384xbf16, #tpu.memory_space<vmem>>, vector<4x384xbf16>,
    %17 = vector.extract_strided_slice %4 {offsets = [0, 48], sizes = [4, 384], strides = [1, 1]} : vector<4x512xbf16> to vector<4x384xbf16>
    %c24 = arith.constant 24 : index
    %c0_12 = arith.constant 0 : index
    %18 = vector.load %arg7[%c24, %c0_12] : memref<36x384xbf16, #tpu.memory_space<vmem>>, vector<4x384xbf16>
    tpu.vector_store %arg7[%c24, %c0_12], %17 {strides = array<i32>} : memref<36x384xbf16, #tpu.memory_space<vmem>>, vector<4x384xbf16>,
    %19 = vector.extract_strided_slice %4 {offsets = [0, 49], sizes = [4, 384], strides = [1, 1]} : vector<4x512xbf16> to vector<4x384xbf16>
    %c28 = arith.constant 28 : index
    %c0_13 = arith.constant 0 : index
    %20 = vector.load %arg7[%c28, %c0_13] : memref<36x384xbf16, #tpu.memory_space<vmem>>, vector<4x384xbf16>
    tpu.vector_store %arg7[%c28, %c0_13], %19 {strides = array<i32>} : memref<36x384xbf16, #tpu.memory_space<vmem>>, vector<4x384xbf16>,
    %21 = vector.extract_strided_slice %4 {offsets = [0, 50], sizes = [4, 384], strides = [1, 1]} : vector<4x512xbf16> to vector<4x384xbf16>
    %c32 = arith.constant 32 : index
    %c0_14 = arith.constant 0 : index
    %22 = vector.load %arg7[%c32, %c0_14] : memref<36x384xbf16, #tpu.memory_space<vmem>>, vector<4x384xbf16>
    tpu.vector_store %arg7[%c32, %c0_14], %21 {strides = array<i32>} : memref<36x384xbf16, #tpu.memory_space<vmem>>, vector<4x384xbf16>,
    %c0_15 = arith.constant 0 : index
    %c0_16 = arith.constant 0 : index
    %23 = vector.load %arg4[%c0_15, %c0_16] : memref<16x36xbf16, #tpu.memory_space<vmem>>, vector<16x36xbf16>
    %c0_17 = arith.constant 0 : index
    %c0_18 = arith.constant 0 : index
    %24 = vector.load %arg7[%c0_17, %c0_18] : memref<36x384xbf16, #tpu.memory_space<vmem>>, vector<36x384xbf16>
    %cst = arith.constant dense<0.000000e+00> : vector<16x384xf32>
    %25 = tpu.matmul %23, %24, %cst {dimension_numbers = #tpu.dot_dimension_numbers<[1], [0], [0], [1], [0, 0, 1, 1], [], []>} : vector<16x36xbf16>, vector<36x384xbf16>, vector<16x384xf32> -> vector<16x384xf32>
    %c0_19 = arith.constant 0 : index
    %c0_20 = arith.constant 0 : index
    %26 = vector.load %arg5[%c0_19, %c0_20] : memref<16x1xf32, #tpu.memory_space<vmem>>, vector<16x1xf32>
    %27 = vector.broadcast %26 : vector<16x1xf32> to vector<16x384xf32>
    %28 = arith.addf %25, %27 : vector<16x384xf32>
    %cst_21 = arith.constant 0.000000e+00 : f32
    %29 = vector.broadcast %cst_21 : f32 to vector<16x384xf32>
    %30 = arith.maximumf %28, %29 : vector<16x384xf32>
    %31 = arith.truncf %30 : vector<16x384xf32> to vector<16x384xbf16>
    %c0_22 = arith.constant 0 : index
    %c0_23 = arith.constant 0 : index
    %c0_24 = arith.constant 0 : index
    %32 = vector.load %arg6[%c0_22, %c0_23, %c0_24] : memref<1x16x384xbf16, #tpu.memory_space<vmem>>, vector<1x16x384xbf16>
    %33 = vector.shape_cast %32 : vector<1x16x384xbf16> to vector<16x384xbf16>
    %34 = vector.shape_cast %31 : vector<16x384xbf16> to vector<1x16x384xbf16>
    tpu.vector_store %arg6[%c0_22, %c0_23, %c0_24], %34 {strides = array<i32>} : memref<1x16x384xbf16, #tpu.memory_space<vmem>>, vector<1x16x384xbf16>,
    return
  }
  func.func @transform_0(%arg0: i32, %arg1: i32) -> (i32, i32, i32) {
    %c0_i32 = arith.constant 0 : i32
    %c0_i32_0 = arith.constant 0 : i32
    return %arg0, %c0_i32, %arg1 : i32, i32, i32
  }
  func.func @transform_1(%arg0: i32, %arg1: i32) -> (i32, i32, i32) {
    %c1_i32 = arith.constant 1 : i32
    %0 = arith.addi %arg1, %c1_i32 : i32
    %c3_i32 = arith.constant 3 : i32
    %1 = arith.muli %0, %c3_i32 : i32
    %c0_i32 = arith.constant 0 : i32
    %c0_i32_0 = arith.constant 0 : i32
    return %arg0, %c0_i32, %1 : i32, i32, i32
  }
  func.func @transform_2(%arg0: i32, %arg1: i32) -> (i32, i32) {
    %c0_i32 = arith.constant 0 : i32
    %c0_i32_0 = arith.constant 0 : i32
    %c0_i32_1 = arith.constant 0 : i32
    return %c0_i32, %c0_i32_0 : i32, i32
  }
  func.func @transform_3(%arg0: i32, %arg1: i32) -> (i32, i32) {
    %c0_i32 = arith.constant 0 : i32
    %c0_i32_0 = arith.constant 0 : i32
    %c0_i32_1 = arith.constant 0 : i32
    return %c0_i32, %c0_i32_0 : i32, i32
  }
  func.func @transform_4(%arg0: i32, %arg1: i32) -> (i32, i32, i32) {
    %c0_i32 = arith.constant 0 : i32
    %c0_i32_0 = arith.constant 0 : i32
    return %arg0, %c0_i32, %arg1 : i32, i32, i32
  }
}

</mosaic_0001>

<llo_original>
// kernel: ecb_pallas_forward.1
$region0: #{ecb_pallas_forward.1}
  #allocation0 [shape = 'u32[]', space=smem, size = 0x4, offset = 0x4, fixed_abs, tag = 'smem constant byte address 0x4 - core index']
  #allocation1 [shape = 'u32[144,128]{1,0:T(1,128)}', space=vmem, size = 0x12000, scoped, tag = 'internal scratch']
  #allocation2 [shape = 'bf16[36,384]{1,0:T(8,128)(2,1)}', space=vmem, size = 0x7800, scoped, tag = 'scratch operand']
  %s0 = inlined_call_operand.vmem [shape: bf16[2,4,528], index: 0, kind: input, shape index: {}, may-alias: {0,1}]
  %s1 = inlined_call_operand.vmem [shape: bf16[2,4,528], index: 1, kind: input, shape index: {}, may-alias: {0,1}]
  %s2 = inlined_call_operand.vmem [shape: bf16[16,36], index: 2, kind: input, shape index: {}]
  %s3 = inlined_call_operand.vmem [shape: f32[16,1], index: 3, kind: input, shape index: {}]
  %s4 = inlined_call_operand.vmem [shape: bf16[2,16,384], index: 4, kind: output, shape index: {}]
  %s5 = sld [smem:[#allocation0]]
  $region49: #{ecb_pallas_forward.1} parent=0
    _
  %s7 = ssub.s32 1, %s5
  %s8 = scalar_select 0, %s7, %s5
  loop: start=0, step=1, limit=4
  $region2: #{ecb_pallas_forward.1} parent=0 // loop_pre_header
    _
  $region3: #{ecb_pallas_forward.1} parent=0 // loop_header
    %s10 = sphi 0, %s14
    %p11 = scmp.ge.s32.totalorder %s10, 4
    %s17 = sphi 0, %s29
    %s18 = sphi 0, %s25
    %s19 = sphi 0, %s17
    %s20 = sphi 0, %s18
    %s21 = sphi 0, %s19
    %s22 = sphi 0, %s20
    %s34 = sphi 0, %s36
    %s37 = sphi 0, %s34
    %s38 = sphi 0, %s37
    %s54 = sphi 0, %s38
    %s66 = sphi 0, %s68
    %s69 = sphi 0, %s66
    %s70 = sphi 0, %s69
    %s86 = sphi 0, %s70
    %s90 = sphi 0, %s90
    %s92 = sphi 0, %s90
    %s93 = sphi 0, %s92
    %s107 = sphi 0, %s93
    %s111 = sphi 0, %s111
    %s113 = sphi 0, %s111
    %s114 = sphi 0, %s113
    %s128 = sphi 0, %s114
    %s136 = sphi 0, %s138
    %s139 = sphi 0, %s136
    %s140 = sphi 0, %s139
    %s156 = sphi 0, %s140
  $region4: #{ecb_pallas_forward.1} parent=0 // loop_header_branch
    %13 = sbr.rel (%p11) target = $region8
  $region5: #{ecb_pallas_forward.1} parent=0 // loop_body
    %s15 = ssub.s32 %s10, 1
    %s16 = ssub.s32 %s10, 2
    %s23 = sadd.s32 1, %s18
    %p24 = scmp.ge.s32.totalorder %s23, 1
    %s25 = scalar_select %p24, 0, %s23
    %s26 = sadd.s32 1, %s17
    %s27 = scalar_select %p24, %s26, %s17
    %p28 = scmp.ge.s32.totalorder %s27, 2
    %s29 = scalar_select %p28, 0, %s27
    %s30 = ssub.s32 %s17, %s29
    %s31 = ssub.s32 %s18, %s25
    %s32 = sor.u32 %s30, %s31
    %p33 = scmp.eq.s32.totalorder %s32, 0
    %s35 = sadd.s32 %s34, 1
    %s36 = scalar_select %p33, %s34, %s35
    %p39 = pneg %p33
    %p40 = scmp.eq.s32.totalorder %s10, 1
    %p41 = por %p39, %p40
    %p42 = scmp.ne.s32.totalorder %s34, %s37
    %p43 = scmp.eq.s32.totalorder %s10, 0
    %p44 = por %p42, %p43
    %p45 = scmp.ne.s32.totalorder %s34, %s37
    %p46 = scmp.eq.s32.totalorder %s15, 1
    %p47 = por %p45, %p46
    %p48 = scmp.ne.s32.totalorder %s37, %s38
    %p49 = scmp.eq.s32.totalorder %s15, 0
    %p50 = por %p48, %p49
    %p51 = scmp.ne.s32.totalorder %s37, %s38
    %p52 = scmp.eq.s32.totalorder %s16, 1
    %p53 = por %p51, %p52
    %p55 = scmp.ne.s32.totalorder %s38, %s54
    %p56 = scmp.eq.s32.totalorder %s16, 0
    %p57 = por %p55, %p56
    %s58 = sadd.s32 %s18, 1
    %s59 = smul.u32 %s58, 3
    %s60 = sadd.s32 %s25, 1
    %s61 = smul.u32 %s60, 3
    %s62 = ssub.s32 %s17, %s29
    %s63 = ssub.s32 %s59, %s61
    %s64 = sor.u32 %s62, %s63
    %p65 = scmp.eq.s32.totalorder %s64, 0
    %s67 = sadd.s32 %s66, 1
    %s68 = scalar_select %p65, %s66, %s67
    %p71 = pneg %p65
    %p72 = scmp.eq.s32.totalorder %s10, 1
    %p73 = por %p71, %p72
    %p74 = scmp.ne.s32.totalorder %s66, %s69
    %p75 = scmp.eq.s32.totalorder %s10, 0
    %p76 = por %p74, %p75
    %p77 = scmp.ne.s32.totalorder %s66, %s69
    %p78 = scmp.eq.s32.totalorder %s15, 1
    %p79 = por %p77, %p78
    %p80 = scmp.ne.s32.totalorder %s69, %s70
    %p81 = scmp.eq.s32.totalorder %s15, 0
    %p82 = por %p80, %p81
    %p83 = scmp.ne.s32.totalorder %s69, %s70
    %p84 = scmp.eq.s32.totalorder %s16, 1
    %p85 = por %p83, %p84
    %p87 = scmp.ne.s32.totalorder %s70, %s86
    %p88 = scmp.eq.s32.totalorder %s16, 0
    %p89 = por %p87, %p88
    %s91 = sadd.s32 %s90, 1
    %p94 = scmp.eq.s32.totalorder %s10, 1
    %p95 = scmp.ne.s32.totalorder %s90, %s92
    %p96 = scmp.eq.s32.totalorder %s10, 0
    %p97 = por %p95, %p96
    %p98 = scmp.ne.s32.totalorder %s90, %s92
    %p99 = scmp.eq.s32.totalorder %s15, 1
    %p100 = por %p98, %p99
    %p101 = scmp.ne.s32.totalorder %s92, %s93
    %p102 = scmp.eq.s32.totalorder %s15, 0
    %p103 = por %p101, %p102
    %p104 = scmp.ne.s32.totalorder %s92, %s93
    %p105 = scmp.eq.s32.totalorder %s16, 1
    %p106 = por %p104, %p105
    %p108 = scmp.ne.s32.totalorder %s93, %s107
    %p109 = scmp.eq.s32.totalorder %s16, 0
    %p110 = por %p108, %p109
    %s112 = sadd.s32 %s111, 1
    %p115 = scmp.eq.s32.totalorder %s10, 1
    %p116 = scmp.ne.s32.totalorder %s111, %s113
    %p117 = scmp.eq.s32.totalorder %s10, 0
    %p118 = por %p116, %p117
    %p119 = scmp.ne.s32.totalorder %s111, %s113
    %p120 = scmp.eq.s32.totalorder %s15, 1
    %p121 = por %p119, %p120
    %p122 = scmp.ne.s32.totalorder %s113, %s114
    %p123 = scmp.eq.s32.totalorder %s15, 0
    %p124 = por %p122, %p123
    %p125 = scmp.ne.s32.totalorder %s113, %s114
    %p126 = scmp.eq.s32.totalorder %s16, 1
    %p127 = por %p125, %p126
    %p129 = scmp.ne.s32.totalorder %s114, %s128
    %p130 = scmp.eq.s32.totalorder %s16, 0
    %p131 = por %p129, %p130
    %s132 = ssub.s32 %s17, %s29
    %s133 = ssub.s32 %s18, %s25
    %s134 = sor.u32 %s132, %s133
    %p135 = scmp.eq.s32.totalorder %s134, 0
    %s137 = sadd.s32 %s136, 1
    %s138 = scalar_select %p135, %s136, %s137
    %p141 = pneg %p135
    %p142 = scmp.eq.s32.totalorder %s10, 1
    %p143 = por %p141, %p142
    %p144 = scmp.ne.s32.totalorder %s136, %s139
    %p145 = scmp.eq.s32.totalorder %s10, 0
    %p146 = por %p144, %p145
    %p147 = scmp.ne.s32.totalorder %s136, %s139
    %p148 = scmp.eq.s32.totalorder %s15, 1
    %p149 = por %p147, %p148
    %p150 = scmp.ne.s32.totalorder %s139, %s140
    %p151 = scmp.eq.s32.totalorder %s15, 0
    %p152 = por %p150, %p151
    %p153 = scmp.ne.s32.totalorder %s139, %s140
    %p154 = scmp.eq.s32.totalorder %s16, 1
    %p155 = por %p153, %p154
    %p157 = scmp.ne.s32.totalorder %s140, %s156
    %p158 = scmp.eq.s32.totalorder %s16, 0
    %p159 = por %p157, %p158
    %p160 = scmp.le.s32.totalorder 1, %s10
    %p161 = scmp.lt.s32.totalorder %s10, 3
    %p162 = pnand %p160, %p161
    %p163 = pneg %p162
    // Predicated region
    $region9: #{ecb_pallas_forward.1} parent=5 // pred_check
      _
    $region10: #{ecb_pallas_forward.1} parent=5 // pred_check_branch
      %165 = sbr.rel (%p162) target = $region12
    $region11: #{ecb_pallas_forward.1} parent=5 // pred_region
      %s166 = ssub.s32 %s10, 1
      // Predicated region
      $region13: #{ecb_pallas_forward.1} parent=11 // pred_check
        %p167 = pneg %p103
      $region14: #{ecb_pallas_forward.1} parent=11 // pred_check_branch
        %169 = sbr.rel (%p167) target = $region16
      $region15: #{ecb_pallas_forward.1} parent=11 // pred_region
        _
      $region16: #{ecb_pallas_forward.1} parent=11 // pred_fallthru
        _
      // Predicated region
      $region17: #{ecb_pallas_forward.1} parent=11 // pred_check
        %p170 = pneg %p124
      $region18: #{ecb_pallas_forward.1} parent=11 // pred_check_branch
        %172 = sbr.rel (%p170) target = $region20
      $region19: #{ecb_pallas_forward.1} parent=11 // pred_region
        _
      $region20: #{ecb_pallas_forward.1} parent=11 // pred_fallthru
        _
    $region12: #{ecb_pallas_forward.1} parent=5 // pred_fallthru
      _
    %p173 = scmp.lt.s32.totalorder %s10, 2
    // Predicated region
    $region21: #{ecb_pallas_forward.1} parent=5 // pred_check
      %p174 = pneg %p173
    $region22: #{ecb_pallas_forward.1} parent=5 // pred_check_branch
      %176 = sbr.rel (%p174) target = $region24
    $region23: #{ecb_pallas_forward.1} parent=5 // pred_region
      // Predicated region
      $region25: #{ecb_pallas_forward.1} parent=23 // pred_check
        %p177 = pneg %p44
      $region26: #{ecb_pallas_forward.1} parent=23 // pred_check_branch
        %179 = sbr.rel (%p177) target = $region28
      $region27: #{ecb_pallas_forward.1} parent=23 // pred_region
        %s180 = smul.u32 3, %s18
        %s181 = ssub.s32 5, %s180
        %p182 = scmp.lt.s32.totalorder %s181, 3
        %s183 = scalar_select %p182, %s181, 3
        %s184 = smul.u32 32, %s183
        %p185 = scmp.lt.s32.totalorder %s17, 1
        %s186 = scalar_select %p185, %s17, 1
        %p187 = scmp.lt.s32.totalorder %s180, 4
        %s188 = scalar_select %p187, %s180, 4
        %s189 = smul.addr %s186, 5
        %s190 = sadd.s32 %s188, %s189
        %s191 = smul.addr %s190, 2
        %s192 = scalar_lea.vmem %s0, %s191
        %s193 = smul.u32 3, %s18
        %s194 = ssub.s32 5, %s193
        %p195 = scmp.lt.s32.totalorder %s194, 3
        %s196 = scalar_select %p195, %s194, 3
        %s197 = smul.u32 32, %s196
      $region28: #{ecb_pallas_forward.1} parent=23 // pred_fallthru
        _
      // Predicated region
      $region29: #{ecb_pallas_forward.1} parent=23 // pred_check
        %p198 = pneg %p76
      $region30: #{ecb_pallas_forward.1} parent=23 // pred_check_branch
        %200 = sbr.rel (%p198) target = $region32
      $region31: #{ecb_pallas_forward.1} parent=23 // pred_region
        %s201 = sadd.s32 %s18, 1
        %s202 = smul.u32 %s201, 3
        %p203 = scmp.lt.s32.totalorder %s17, 1
        %s204 = scalar_select %p203, %s17, 1
        %p205 = scmp.lt.s32.totalorder %s202, 4
        %s206 = scalar_select %p205, %s202, 4
        %s207 = smul.addr %s204, 5
        %s208 = sadd.s32 %s206, %s207
        %s209 = smul.addr %s208, 2
        %s210 = scalar_lea.vmem %s1, %s209
        %s211 = sadd.s32 %s18, 1
        %s212 = smul.u32 %s211, 3
      $region32: #{ecb_pallas_forward.1} parent=23 // pred_fallthru
        _
    $region24: #{ecb_pallas_forward.1} parent=5 // pred_fallthru
      _
    %p213 = scmp.le.s32.totalorder 1, %s10
    %p214 = scmp.lt.s32.totalorder %s10, 3
    %p215 = pnand %p213, %p214
    %p216 = pneg %p215
    // Predicated region
    $region33: #{ecb_pallas_forward.1} parent=5 // pred_check
      _
    $region34: #{ecb_pallas_forward.1} parent=5 // pred_check_branch
      %218 = sbr.rel (%p215) target = $region36
    $region35: #{ecb_pallas_forward.1} parent=5 // pred_region
      %s219 = ssub.s32 %s10, 1
      %s220 = smul.u32 3, %s20
      %s221 = ssub.s32 5, %s220
      %p222 = scmp.lt.s32.totalorder %s221, 3
      %s223 = scalar_select %p222, %s221, 3
      %s224 = smul.u32 32, %s223
      %p225 = scmp.lt.s32.totalorder %s19, 1
      %s226 = scalar_select %p225, %s19, 1
      %p227 = scmp.lt.s32.totalorder %s220, 4
      %s228 = scalar_select %p227, %s220, 4
      %s229 = smul.addr %s226, 5
      %s230 = sadd.s32 %s228, %s229
      %s231 = smul.addr %s230, 2
      %s232 = scalar_lea.vmem %s0, %s231
      %p233 = pneg %p50
      %p234 = pneg %p47
      %s235 = sadd.s32 %s20, 1
      %s236 = smul.u32 %s235, 3
      %p237 = scmp.lt.s32.totalorder %s19, 1
      %s238 = scalar_select %p237, %s19, 1
      %p239 = scmp.lt.s32.totalorder %s236, 4
      %s240 = scalar_select %p239, %s236, 4
      %s241 = smul.addr %s238, 5
      %s242 = sadd.s32 %s240, %s241
      %s243 = smul.addr %s242, 2
      %s244 = scalar_lea.vmem %s1, %s243
      %p245 = pneg %p82
      %p246 = pneg %p79
      %p247 = pneg %p103
      %p248 = pneg %p100
      %p249 = pneg %p124
      %p250 = pneg %p121
      %p251 = pneg %p152
      %p252 = pneg %p149
      %s253 = smul.u32 3, %s20
      %p254 = scmp.lt.s32.totalorder %s19, 1
      %s255 = scalar_select %p254, %s19, 1
      %p256 = scmp.lt.s32.totalorder %s253, 2
      %s257 = scalar_select %p256, %s253, 2
      %s258 = smul.addr %s255, 6
      %s259 = sadd.s32 %s257, %s258
      %s260 = smul.addr %s259, 4
      %s261 = scalar_lea.vmem %s4, %s260
      %s262 = smul.u32 3, %s20
      %s263 = ssub.s32 5, %s262
      %p264 = scmp.lt.s32.totalorder %s263, 3
      %s265 = scalar_select %p264, %s263, 3
      %s266 = smul.u32 32, %s265
      %p267 = scmp.lt.s32.totalorder %s19, 1
      %s268 = scalar_select %p267, %s19, 1
      %p269 = scmp.lt.s32.totalorder %s262, 4
      %s270 = scalar_select %p269, %s262, 4
      %s271 = smul.addr %s268, 5
      %s272 = sadd.s32 %s270, %s271
      %s273 = smul.addr %s272, 2
      %s274 = scalar_lea.vmem %s0, %s273
      %s275 = smul.u32 3, %s20
      %s276 = ssub.s32 5, %s275
      %p277 = scmp.lt.s32.totalorder %s276, 3
      %s278 = scalar_select %p277, %s276, 3
      %s279 = smul.u32 32, %s278
      %s280 = sadd.s32 %s20, 1
      %s281 = smul.u32 %s280, 3
      %p282 = scmp.lt.s32.totalorder %s19, 1
      %s283 = scalar_select %p282, %s19, 1
      %p284 = scmp.lt.s32.totalorder %s281, 4
      %s285 = scalar_select %p284, %s281, 4
      %s286 = smul.addr %s283, 5
      %s287 = sadd.s32 %s285, %s286
      %s288 = smul.addr %s287, 2
      %s289 = scalar_lea.vmem %s1, %s288
      %s290 = sadd.s32 %s20, 1
      %s291 = smul.u32 %s290, 3
      %s292 = smul.u32 3, %s20
      %p293 = scmp.lt.s32.totalorder %s19, 1
      %s294 = scalar_select %p293, %s19, 1
      %p295 = scmp.lt.s32.totalorder %s292, 2
      %s296 = scalar_select %p295, %s292, 2
      %s297 = smul.addr %s294, 6
      %s298 = sadd.s32 %s296, %s297
      %s299 = smul.addr %s298, 4
      %s300 = scalar_lea.vmem %s4, %s299
      %s301 = smul.u32 3, %s20
      %v303 = vld [vmem:[%s274] sm:$0x3f]
      %v304 = vld [vmem:[%s289] sm:$0x3]
      %v306 = vcombine.high %v303, %v303
      %v308 = vunpack.c.l.s4 1983009808
      %v309 = vunpack.c.0.s8 %v308
      %v310 = vlaneseq
      %v311 = vshrl.u32 %v310, 7
      %v312 = vsub.s32 %v309, %v311
      %v313 = vrot.slane %v303, %v312
      %v315 = vunpack.c.l.s4 1983009808
      %v316 = vunpack.c.0.s8 %v315
      %v317 = vlaneseq
      %v318 = vshrl.u32 %v317, 7
      %v319 = vsub.s32 %v316, %v318
      %v320 = vrot.slane %v306, %v319
      %v321 = vcombine.high %v313, %v313
      %v322 = vunpack.c.l.b16 %v313
      %v323 = vunpack.c.l.b16 %v321
      %v324 = vunpack.c.l.b16 %v320
      %v325 = vpack.c.b16 %v323, %v322
      %v326 = vpack.c.b16 %v324, %v324
      %329 = vst [vmem:[#allocation2] sm:$0x33] %v325
      %330 = vst [vmem:[#allocation2 + $0x8] sm:$0x3] %v326
      %v332 = vunpack.c.l.b16 %v304
      %v333 = vpack.c.b16 %v332, %v324
      %v334 = vrot.slane %v325, 6
      %v335 = vrot.slane %v333, 6
      %336 = vrot.lane.b32.xlu0 %v334, 127
      %v337 = vpop.permute.xlu0 %336
      %338 = vrot.lane.b32.xlu0 %v335, 127
      %v339 = vpop.permute.xlu0 %338
      %v340 = vrot.slane %v337, 4
      %v341 = vrot.slane %v339, 4
      %vm342 = vcmask 1043456
      %v343 = vsel %vm342, %v340, %v341
      %vm344 = vcmask 1039360
      %v345 = vsel %vm344, %v337, %v343
      %v346 = vsel %vm344, %v339, %v341
      %349 = vst [vmem:[#allocation2] sm:$0xcc] %v345
      %350 = vst [vmem:[#allocation2 + $0x8] sm:$0xc] %v346
      %351 = vrot.lane.b32.xlu0 %v325, 126
      %v352 = vpop.permute.xlu0 %351
      %353 = vrot.lane.b32.xlu0 %v333, 126
      %v354 = vpop.permute.xlu0 %353
      %v355 = vrot.slane %v352, 4
      %v356 = vrot.slane %v354, 4
      %v357 = vsel %vm342, %v355, %v356
      %vm358 = vcmask 1031168
      %v359 = vsel %vm358, %v352, %v357
      %v360 = vsel %vm358, %v354, %v356
      %363 = vst [vmem:[#allocation2 + $0xc] sm:$0x33] %v359
      %364 = vst [vmem:[#allocation2 + $0x14] sm:$0x3] %v360
      %365 = vrot.lane.b32.xlu0 %v334, 104
      %v366 = vpop.permute.xlu0 %365
      %367 = vrot.lane.b32.xlu0 %v335, 104
      %v368 = vpop.permute.xlu0 %367
      %v369 = vrot.slane %v366, 4
      %v370 = vrot.slane %v368, 4
      %v371 = vsel %vm342, %v369, %v370
      %vm372 = vcmask 850944
      %v373 = vsel %vm372, %v366, %v371
      %v374 = vsel %vm372, %v368, %v370
      %377 = vst [vmem:[#allocation2 + $0xc] sm:$0xcc] %v373
      %378 = vst [vmem:[#allocation2 + $0x14] sm:$0xc] %v374
      %379 = vrot.lane.b32.xlu0 %v325, 103
      %v380 = vpop.permute.xlu0 %379
      %381 = vrot.lane.b32.xlu0 %v333, 103
      %v382 = vpop.permute.xlu0 %381
      %v383 = vrot.slane %v380, 4
      %v384 = vrot.slane %v382, 4
      %v385 = vsel %vm342, %v383, %v384
      %vm386 = vcmask 842752
      %v387 = vsel %vm386, %v380, %v385
      %v388 = vsel %vm386, %v382, %v384
      %391 = vst [vmem:[#allocation2 + $0x18] sm:$0x33] %v387
      %392 = vst [vmem:[#allocation2 + $0x20] sm:$0x3] %v388
      %393 = vrot.lane.b32.xlu0 %v334, 102
      %v394 = vpop.permute.xlu0 %393
      %395 = vrot.lane.b32.xlu0 %v335, 102
      %v396 = vpop.permute.xlu0 %395
      %v397 = vrot.slane %v394, 4
      %v398 = vrot.slane %v396, 4
      %v399 = vsel %vm342, %v397, %v398
      %vm400 = vcmask 834560
      %v401 = vsel %vm400, %v394, %v399
      %v402 = vsel %vm400, %v396, %v398
      %405 = vst [vmem:[#allocation2 + $0x18] sm:$0xcc] %v401
      %406 = vst [vmem:[#allocation2 + $0x20] sm:$0xc] %v402
      %407 = vrot.lane.b32.xlu0 %v325, 80
      %v408 = vpop.permute.xlu0 %407
      %409 = vrot.lane.b32.xlu0 %v333, 80
      %v410 = vpop.permute.xlu0 %409
      %v411 = vrot.slane %v408, 4
      %v412 = vrot.slane %v410, 4
      %v413 = vsel %vm342, %v411, %v412
      %vm414 = vcmask 654336
      %v415 = vsel %vm414, %v408, %v413
      %v416 = vsel %vm414, %v410, %v412
      %419 = vst [vmem:[#allocation2 + $0x24] sm:$0x33] %v415
      %420 = vst [vmem:[#allocation2 + $0x2c] sm:$0x3] %v416
      %421 = vrot.lane.b32.xlu0 %v334, 79
      %v422 = vpop.permute.xlu0 %421
      %423 = vrot.lane.b32.xlu0 %v335, 79
      %v424 = vpop.permute.xlu0 %423
      %v425 = vrot.slane %v422, 4
      %v426 = vrot.slane %v424, 4
      %v427 = vsel %vm342, %v425, %v426
      %vm428 = vcmask 646144
      %v429 = vsel %vm428, %v422, %v427
      %v430 = vsel %vm428, %v424, %v426
      %433 = vst [vmem:[#allocation2 + $0x24] sm:$0xcc] %v429
      %434 = vst [vmem:[#allocation2 + $0x2c] sm:$0xc] %v430
      %435 = vrot.lane.b32.xlu0 %v325, 78
      %v436 = vpop.permute.xlu0 %435
      %437 = vrot.lane.b32.xlu0 %v333, 78
      %v438 = vpop.permute.xlu0 %437
      %v439 = vrot.slane %v436, 4
      %v440 = vrot.slane %v438, 4
      %v441 = vsel %vm342, %v439, %v440
      %vm442 = vcmask 637952
      %v443 = vsel %vm442, %v436, %v441
      %v444 = vsel %vm442, %v438, %v440
      %447 = vst [vmem:[#allocation2 + $0x30] sm:$0x33] %v443
      %448 = vst [vmem:[#allocation2 + $0x38] sm:$0x3] %v444
      %v449 = vld [vmem:[%s2] sm:$0xf]
      %v450 = vld [vmem:[%s2 + $0x4] sm:$0xf]
      %v451 = vld [vmem:[#allocation2] sm:$0xff]
      %v452 = vld [vmem:[#allocation2 + $0x8] sm:$0xf]
      %v453 = vld [vmem:[#allocation2 + $0xc] sm:$0xff]
      %v454 = vld [vmem:[#allocation2 + $0x14] sm:$0xf]
      %v455 = vld [vmem:[#allocation2 + $0x18] sm:$0xff]
      %v456 = vld [vmem:[#allocation2 + $0x20] sm:$0xf]
      %v457 = vld [vmem:[#allocation2 + $0x24] sm:$0xff]
      %v458 = vld [vmem:[#allocation2 + $0x2c] sm:$0xf]
      %v459 = vld [vmem:[#allocation2 + $0x30] sm:$0x33]
      %v460 = vld [vmem:[#allocation2 + $0x38] sm:$0x3]
      %v461 = vld [vmem:[%s3] sm:$0xff]
      %v462 = vld [vmem:[%s3 + $0x8] sm:$0xff]
      %464 = vset.pattern.permute.xlu0 0
      %465 = vperm.xlu0 %464, %v461
      %v466 = vpop.permute.xlu0 %465
      %469 = vset.pattern.permute.xlu0 0
      %470 = vperm.xlu0 %469, %v462
      %v471 = vpop.permute.xlu0 %470
      %v475 = vunpack.c.l.b16 %v449
      %v476 = vunpack.c.l.b16 %v450
      %v477 = vpack.c.b16 %v476, %v475
      %v488 = vunpack.c.l.b16 %v451
      %v489 = vunpack.c.h.b16 %v451
      %v490 = vunpack.c.l.b16 %v452
      %v491 = vunpack.c.l.b16 %v453
      %v492 = vunpack.c.h.b16 %v453
      %v493 = vunpack.c.l.b16 %v454
      %v494 = vunpack.c.l.b16 %v455
      %v495 = vunpack.c.h.b16 %v455
      %v496 = vunpack.c.l.b16 %v456
      %v497 = vunpack.c.l.b16 %v457
      %v498 = vunpack.c.h.b16 %v457
      %v499 = vunpack.c.l.b16 %v458
      %v500 = vunpack.c.l.b16 %v459
      %v501 = vunpack.c.h.b16 %v459
      %v502 = vunpack.c.l.b16 %v460
      %v503 = vpack.c.b16 %v491, %v488
      %v504 = vpack.c.b16 %v492, %v489
      %v505 = vpack.c.b16 %v493, %v490
      %v506 = vpack.c.b16 %v497, %v494
      %v507 = vpack.c.b16 %v498, %v495
      %v508 = vpack.c.b16 %v499, %v496
      %v509 = vpack.c.b16 %v500, %v500
      %v510 = vpack.c.b16 %v501, %v501
      %v511 = vpack.c.b16 %v502, %v502
      %vm518 = vcmask 293888
      %v520 = vsel %vm518, %v477, 0
      %vm522 = vcmask 1041408
      %v524 = vsel %vm522, %v509, 0
      %v527 = vsel %vm522, %v510, 0
      %v530 = vsel %vm522, %v511, 0
      %532 = vmatprep.subr.bf16.mxu0 0
      %533 = vmatpush1.bf16.msra.mxu0 0
      %534 = vmatprep.subr.bf16.mxu0 0
      %535 = vmatpush1.bf16.msra.mxu0 0
      %536 = vmatprep.subr.bf16.mxu0 0
      %537 = vmatpush1.bf16.msra.mxu0 0
      %538 = vmatprep.subr.bf16.mxu0 0
      %539 = vmatpush1.bf16.msra.mxu0 0
      %540 = vmatprep.subr.bf16.mxu0 0
      %541 = vmatpush1.bf16.msra.mxu0 0
      %542 = vmatprep.subr.bf16.mxu0 %v527
      %543 = vmatpush1.bf16.msra.mxu0 %v524
      %544 = vmatprep.subr.bf16.mxu0 %v507
      %545 = vmatpush1.bf16.msra.mxu0 %v506
      %546 = vmatprep.subr.bf16.mxu0 %v504
      %547 = vmatpush1.bf16.msra.mxu0 %v503
      %548 = vmatprep.subr.bf16.mxu0 0
      %549 = vmatpush2.bf16.msra.mxu0 0
      %550 = vmatprep.subr.bf16.mxu0 0
      %551 = vmatpush2.bf16.msra.mxu0 0
      %552 = vmatprep.subr.bf16.mxu0 0
      %553 = vmatpush2.bf16.msra.mxu0 0
      %554 = vmatprep.subr.bf16.mxu0 0
      %555 = vmatpush2.bf16.msra.mxu0 0
      %556 = vmatprep.subr.bf16.mxu0 0
      %557 = vmatpush2.bf16.msra.mxu0 0
      %558 = vmatprep.subr.bf16.mxu0 0
      %559 = vmatpush2.bf16.msra.mxu0 0
      %560 = vmatprep.subr.bf16.mxu0 0
      %561 = vmatpush2.bf16.msra.mxu0 0
      %562 = vmatprep.subr.bf16.mxu0 0
      %563 = vmatpush2.bf16.msra.mxu0 0
      %564 = vmatprep.mubr.bf16.mxu0 0
      %565 = vmatmul.mubr.bf16.gmra.mxu0 %v520
      %v566 = vpop.f32.mrf.mxu0
      %v567 = vadd.f32 %v466, %v566
      %v568 = vpop.f32.mrf.mxu0
      %v569 = vadd.f32 %v466, %v568
      %v570 = vpop.f32.mrf.mxu0
      %v571 = vadd.f32 %v471, %v570
      %v572 = vpop.f32.mrf.mxu0
      %v573 = vadd.f32 %v471, %v572
      %574 = vdwg.mxu0
      %575 = vmatprep.subr.bf16.mxu0 0
      %576 = vmatpush1.bf16.msra.mxu0 0
      %577 = vmatprep.subr.bf16.mxu0 0
      %578 = vmatpush1.bf16.msra.mxu0 0
      %579 = vmatprep.subr.bf16.mxu0 0
      %580 = vmatpush1.bf16.msra.mxu0 0
      %581 = vmatprep.subr.bf16.mxu0 0
      %582 = vmatpush1.bf16.msra.mxu0 0
      %583 = vmatprep.subr.bf16.mxu0 0
      %584 = vmatpush1.bf16.msra.mxu0 0
      %585 = vmatprep.subr.bf16.mxu0 0
      %586 = vmatpush1.bf16.msra.mxu0 %v530
      %587 = vmatprep.subr.bf16.mxu0 0
      %588 = vmatpush1.bf16.msra.mxu0 %v508
      %589 = vmatprep.subr.bf16.mxu0 0
      %590 = vmatpush1.bf16.msra.mxu0 %v505
      %591 = vmatprep.subr.bf16.mxu0 0
      %592 = vmatpush2.bf16.msra.mxu0 0
      %593 = vmatprep.subr.bf16.mxu0 0
      %594 = vmatpush2.bf16.msra.mxu0 0
      %595 = vmatprep.subr.bf16.mxu0 0
      %596 = vmatpush2.bf16.msra.mxu0 0
      %597 = vmatprep.subr.bf16.mxu0 0
      %598 = vmatpush2.bf16.msra.mxu0 0
      %599 = vmatprep.subr.bf16.mxu0 0
      %600 = vmatpush2.bf16.msra.mxu0 0
      %601 = vmatprep.subr.bf16.mxu0 0
      %602 = vmatpush2.bf16.msra.mxu0 0
      %603 = vmatprep.subr.bf16.mxu0 0
      %604 = vmatpush2.bf16.msra.mxu0 0
      %605 = vmatprep.subr.bf16.mxu0 0
      %606 = vmatpush2.bf16.msra.mxu0 0
      %607 = vmatprep.mubr.bf16.mxu0 0
      %608 = vmatmul.mubr.bf16.gmra.mxu0 %v520
      %v609 = vpop.f32.mrf.mxu0
      %v610 = vadd.f32 %v466, %v609
      %v611 = vpop.f32.mrf.mxu0
      %v612 = vpop.f32.mrf.mxu0
      %v613 = vadd.f32 %v471, %v612
      %v614 = vpop.f32.mrf.mxu0
      %615 = vdwg.mxu0
      %v616 = vmax.f32 %v567, 0.0
      %v617 = vmax.f32 %v569, 0.0
      %v618 = vmax.f32 %v610, 0.0
      %v619 = vmax.f32 %v571, 0.0
      %v620 = vmax.f32 %v573, 0.0
      %v621 = vmax.f32 %v613, 0.0
      %v622 = vpack.c.bf16 %v619, %v616
      %v623 = vpack.c.bf16 %v620, %v617
      %v624 = vpack.c.bf16 %v621, %v618
      %v628 = vunpack.c.l.b16 %v622
      %v629 = vunpack.c.l.b16 %v623
      %v630 = vunpack.c.l.b16 %v624
      %v631 = vunpack.c.h.b16 %v622
      %v632 = vunpack.c.h.b16 %v623
      %v633 = vunpack.c.h.b16 %v624
      %v634 = vpack.c.b16 %v629, %v628
      %v635 = vpack.c.b16 %v630, %v630
      %v636 = vpack.c.b16 %v632, %v631
      %v637 = vpack.c.b16 %v633, %v633
      %642 = vst [vmem:[%s300] sm:$0xff] %v634
      %643 = vst [vmem:[%s300 + $0x8] sm:$0xf] %v635
      %644 = vst [vmem:[%s300 + $0xc] sm:$0xff] %v636
      %645 = vst [vmem:[%s300 + $0x14] sm:$0xf] %v637
      %s646 = smul.u32 3, %s20
      %p647 = scmp.lt.s32.totalorder %s19, 1
      %s648 = scalar_select %p647, %s19, 1
      %p649 = scmp.lt.s32.totalorder %s646, 2
      %s650 = scalar_select %p649, %s646, 2
      %s651 = smul.addr %s648, 6
      %s652 = sadd.s32 %s650, %s651
      %s653 = smul.addr %s652, 4
      %s654 = scalar_lea.vmem %s4, %s653
      // Predicated region
      $region37: #{ecb_pallas_forward.1} parent=35 // pred_check
        %p655 = pneg %p149
      $region38: #{ecb_pallas_forward.1} parent=35 // pred_check_branch
        %657 = sbr.rel (%p655) target = $region40
      $region39: #{ecb_pallas_forward.1} parent=35 // pred_region
        %s658 = smul.u32 3, %s20
      $region40: #{ecb_pallas_forward.1} parent=35 // pred_fallthru
        _
    $region36: #{ecb_pallas_forward.1} parent=5 // pred_fallthru
      _
    %p659 = scmp.le.s32.totalorder 2, %s10
    // Predicated region
    $region41: #{ecb_pallas_forward.1} parent=5 // pred_check
      %p660 = pneg %p659
    $region42: #{ecb_pallas_forward.1} parent=5 // pred_check_branch
      %662 = sbr.rel (%p660) target = $region44
    $region43: #{ecb_pallas_forward.1} parent=5 // pred_region
      %s663 = ssub.s32 %s10, 2
      // Predicated region
      $region45: #{ecb_pallas_forward.1} parent=43 // pred_check
        %p664 = pneg %p155
      $region46: #{ecb_pallas_forward.1} parent=43 // pred_check_branch
        %666 = sbr.rel (%p664) target = $region48
      $region47: #{ecb_pallas_forward.1} parent=43 // pred_region
        %s667 = smul.u32 3, %s22
        %p668 = scmp.lt.s32.totalorder %s21, 1
        %s669 = scalar_select %p668, %s21, 1
        %p670 = scmp.lt.s32.totalorder %s667, 2
        %s671 = scalar_select %p670, %s667, 2
        %s672 = smul.addr %s669, 6
        %s673 = sadd.s32 %s671, %s672
        %s674 = smul.addr %s673, 4
        %s675 = scalar_lea.vmem %s4, %s674
      $region48: #{ecb_pallas_forward.1} parent=43 // pred_fallthru
        _
    $region44: #{ecb_pallas_forward.1} parent=5 // pred_fallthru
      _
  $region6: #{ecb_pallas_forward.1} parent=0 // loop_footer
    %s14 = sadd.s32 1, %s10
  $region7: #{ecb_pallas_forward.1} parent=0 // loop_footer_branch
    %9 = sbr.rel target = $region3
  $region8: #{ecb_pallas_forward.1} parent=0 // loop_exit
    _

</llo_original>
